<compile_context>
chip_gen: v7x
topology: tpu7x:2x2x1
jax: 0.10.0
libtpu: 0.0.40
codegen_flags: <defaults>
</compile_context>

<pallas_src>
import jax
import jax.numpy as jnp
from jax.experimental import pallas as pl
from jax.experimental.pallas import tpu as pltpu


# Per-array block budget (bytes). in+out double-buffered ~= 4x this, so ~16 MiB
# of pipeline buffers -> fits the explicit 32 MiB scoped limit on every
# generation (v7x physical VMEM is 64 MiB, v5e default scoped is only 16 MiB).
_BLOCK_BUDGET_BYTES = 4 * 1024 * 1024
_VMEM_LIMIT_BYTES = 32 * 1024 * 1024


# ---------------------------------------------------------------------------
# Fast path: whole (Bt, C, HW) slab per grid step, everything fused.
# ---------------------------------------------------------------------------
def _ca_fused_kernel(x_ref, w1t_ref, b1_ref, w2t_ref, b2_ref, o_ref):
    # x_ref: (Bt, C, HW); w1t: (C, Cr); b1: (1, Cr); w2t: (Cr, C); b2: (1, C)
    x = x_ref[...]
    bt = x.shape[0]

    # Global avg / max pool over the spatial (lane) axis -> (Bt, C)
    avg_p = jnp.mean(x, axis=-1)
    max_p = jnp.max(x, axis=-1)

    # Fused shared MLP: one dot per layer over both pooled operands (N = 2*Bt)
    p = jnp.concatenate([avg_p, max_p], axis=0)                    # (2*Bt, C)
    h = jnp.dot(p, w1t_ref[...], preferred_element_type=jnp.float32) + b1_ref[...]
    h = jnp.maximum(h, 0.0)                                        # (2*Bt, Cr)
    att = jnp.dot(h, w2t_ref[...], preferred_element_type=jnp.float32) + b2_ref[...]
    att_sum = att[:bt] + att[bt:]                                  # (Bt, C)

    scale = jax.nn.sigmoid(att_sum)                                # (Bt, C)
    o_ref[...] = x * scale[:, :, None]                             # broadcast over HW


def _pick_bt(B, C, HW, budget_bytes):
    """Largest batch-block that fits the per-array VMEM budget while keeping
    enough grid steps for megacore sharding (v7x)."""
    per_elem = C * HW * 4
    min_steps = min(4, B) if B >= 2 else 1
    best = 1
    for d in range(1, B + 1):
        if B % d:
            continue
        if d * per_elem > budget_bytes:
            continue
        if B // d < min_steps:
            continue
        best = max(best, d)
    return best


def _ca_fused(x, w1t, b1r, w2t, b2r, budget_bytes):
    B, C, HW = x.shape
    Cr = w1t.shape[1]
    Bt = _pick_bt(B, C, HW, budget_bytes)

    cost = pl.CostEstimate(
        flops=3 * B * C * HW + 4 * B * C * Cr,
        transcendentals=2 * B * C,
        bytes_accessed=2 * B * C * HW * 4,
    )

    return pl.pallas_call(
        _ca_fused_kernel,
        out_shape=jax.ShapeDtypeStruct((B, C, HW), jnp.float32),
        grid_spec=pltpu.PrefetchScalarGridSpec(
            num_scalar_prefetch=0,
            grid=(B // Bt,),
            in_specs=[
                pl.BlockSpec((Bt, C, HW), lambda b: (b, 0, 0)),
                pl.BlockSpec((C, Cr), lambda b: (0, 0)),
                pl.BlockSpec((1, Cr), lambda b: (0, 0)),
                pl.BlockSpec((Cr, C), lambda b: (0, 0)),
                pl.BlockSpec((1, C), lambda b: (0, 0)),
            ],
            out_specs=pl.BlockSpec((Bt, C, HW), lambda b: (b, 0, 0)),
        ),
        compiler_params=pltpu.CompilerParams(
            dimension_semantics=("parallel",),
            vmem_limit_bytes=_VMEM_LIMIT_BYTES,
        ),
        cost_estimate=cost,
    )(x, w1t, b1r, w2t, b2r)


# ---------------------------------------------------------------------------
# Fallback path for large C*HW: tiled pooling -> tiny MLP in JAX -> tiled scale
# ---------------------------------------------------------------------------
def _pool_kernel(x_ref, sum_ref, max_ref):
    # x_ref: (1, C, tile_hw); sum_ref / max_ref: (1, C, 1) accumulators
    @pl.when(pl.program_id(1) == 0)
    def _():
        sum_ref[...] = jnp.zeros_like(sum_ref)
        max_ref[...] = jnp.full_like(max_ref, -jnp.inf)

    x = x_ref[...]
    sum_ref[...] += jnp.sum(x, axis=-1, keepdims=True)
    max_ref[...] = jnp.maximum(max_ref[...], jnp.max(x, axis=-1, keepdims=True))


def _scale_kernel(x_ref, s_ref, o_ref):
    # x_ref: (1, C, tile_hw); s_ref: (1, C, 1)
    o_ref[...] = x_ref[...] * s_ref[...]


def _pick_tile_hw(HW, C, budget_bytes):
    """Largest divisor of HW whose (1, C, tile) block fits the budget,
    preferring 128-aligned (lane-dense) tiles."""
    per_lane = C * 4
    best_any = None
    for d in range(HW, 0, -1):
        if HW % d:
            continue
        if d * per_lane > budget_bytes:
            continue
        if d % 128 == 0:
            return d
        if best_any is None:
            best_any = d
    # TODO(synk): HW has no 128-aligned divisor that fits the budget; the
    # unaligned tile below works but pays masked partial stores — pad HW to a
    # multiple of 128 in production shapes instead.
    return best_any if best_any is not None else 1


def _ca_tiled(x, w1t, b1r, w2t, b2r, budget_bytes):
    B, C, HW = x.shape
    tile_hw = _pick_tile_hw(HW, C, budget_bytes)
    n_t = HW // tile_hw

    # Phase 1: global sum + max pooling, HW axis tiled & last ('arbitrary').
    sums, maxs = pl.pallas_call(
        _pool_kernel,
        out_shape=(
            jax.ShapeDtypeStruct((B, C, 1), jnp.float32),
            jax.ShapeDtypeStruct((B, C, 1), jnp.float32),
        ),
        grid_spec=pltpu.PrefetchScalarGridSpec(
            num_scalar_prefetch=0,
            grid=(B, n_t),
            in_specs=[pl.BlockSpec((1, C, tile_hw), lambda b, t: (b, 0, t))],
            out_specs=(
                pl.BlockSpec((1, C, 1), lambda b, t: (b, 0, 0)),
                pl.BlockSpec((1, C, 1), lambda b, t: (b, 0, 0)),
            ),
        ),
        compiler_params=pltpu.CompilerParams(
            dimension_semantics=("parallel", "arbitrary"),
            vmem_limit_bytes=_VMEM_LIMIT_BYTES,
        ),
        cost_estimate=pl.CostEstimate(
            flops=2 * B * C * HW,
            transcendentals=0,
            bytes_accessed=B * C * HW * 4,
        ),
    )(x)

    # Phase 2: tiny shared MLP + sigmoid in plain JAX (negligible cost).
    avg_p = sums[:, :, 0] / HW                       # (B, C)
    max_p = maxs[:, :, 0]                            # (B, C)
    p = jnp.concatenate([avg_p, max_p], axis=0)      # (2B, C)
    h = jnp.maximum(p @ w1t + b1r, 0.0)
    att = h @ w2t + b2r
    scale = jax.nn.sigmoid(att[:B] + att[B:])[:, :, None]   # (B, C, 1)

    # Phase 3: tiled broadcast multiply.
    return pl.pallas_call(
        _scale_kernel,
        out_shape=jax.ShapeDtypeStruct((B, C, HW), jnp.float32),
        grid_spec=pltpu.PrefetchScalarGridSpec(
            num_scalar_prefetch=0,
            grid=(B, n_t),
            in_specs=[
                pl.BlockSpec((1, C, tile_hw), lambda b, t: (b, 0, t)),
                pl.BlockSpec((1, C, 1), lambda b, t: (b, 0, 0)),
            ],
            out_specs=pl.BlockSpec((1, C, tile_hw), lambda b, t: (b, 0, t)),
        ),
        compiler_params=pltpu.CompilerParams(
            dimension_semantics=("parallel", "parallel"),
            vmem_limit_bytes=_VMEM_LIMIT_BYTES,
        ),
        cost_estimate=pl.CostEstimate(
            flops=B * C * HW,
            transcendentals=0,
            bytes_accessed=2 * B * C * HW * 4,
        ),
    )(x, scale)


# ---------------------------------------------------------------------------
# Public wrapper
# ---------------------------------------------------------------------------
def ca_layer(x_nchw, w1, b1, w2, b2, *, block_budget_bytes=_BLOCK_BUDGET_BYTES):
    """x_nchw: (B, C, H, W) float32; w1: (Cr, C); b1: (Cr,); w2: (C, Cr); b2: (C,).
    Returns (B, C, H, W)."""
    B, C, H, W = x_nchw.shape
    HW = H * W
    Cr = w1.shape[0]

    x = x_nchw.reshape(B, C, HW).astype(jnp.float32)
    w1t = w1.astype(jnp.float32).T            # (C, Cr)
    w2t = w2.astype(jnp.float32).T            # (Cr, C)
    b1r = b1.astype(jnp.float32).reshape(1, Cr)
    b2r = b2.astype(jnp.float32).reshape(1, C)

    if C * HW * 4 <= block_budget_bytes:
        out = _ca_fused(x, w1t, b1r, w2t, b2r, block_budget_bytes)
    else:
        out = _ca_tiled(x, w1t, b1r, w2t, b2r, block_budget_bytes)
    return out.reshape(B, C, H, W)


def ca_layer_ref(x, w1, b1, w2, b2):
    # pure-JAX reference matching the PyTorch forward
    avg_p = jnp.mean(x, axis=(2, 3))                      # (B, C)
    max_p = jnp.max(x, axis=(2, 3))                       # (B, C)

    def mlp(p):
        h = jnp.maximum(p @ w1.T + b1, 0.0)
        return h @ w2.T + b2

    att = mlp(avg_p) + mlp(max_p)
    scale = jax.nn.sigmoid(att)[:, :, None, None]
    return x * scale


if __name__ == "__main__":
    B, C, H, W = 2, 32, 16, 16
    reduction = 16
    Cr = C // reduction  # 2

    key = jax.random.PRNGKey(0)
    kx, k1, k2, k3, k4 = jax.random.split(key, 5)

    x = jax.random.normal(kx, (B, C, H, W), dtype=jnp.float32)
    # Conv2d(C, Cr, 1) weight is (Cr, C, 1, 1) -> squeeze to (Cr, C); bias (Cr,)
    w1 = jax.random.normal(k1, (Cr, C), dtype=jnp.float32) * 0.1
    b1 = jax.random.normal(k2, (Cr,), dtype=jnp.float32) * 0.1
    # Conv2d(Cr, C, 1) weight is (C, Cr, 1, 1) -> (C, Cr); bias (C,)
    w2 = jax.random.normal(k3, (C, Cr), dtype=jnp.float32) * 0.1
    b2 = jax.random.normal(k4, (C,), dtype=jnp.float32) * 0.1

    ref = ca_layer_ref(x, w1, b1, w2, b2)

    # Fast (fused, batched-block) path.
    out = ca_layer(x, w1, b1, w2, b2)
    out = jax.block_until_ready(out)
    assert out.shape == (B, C, H, W)
    assert jnp.allclose(out, ref, atol=1e-5, rtol=1e-5), "fused path mismatch vs reference"

    # Force the tiled large-activation fallback on the same inputs to verify it too.
    out2 = ca_layer(x, w1, b1, w2, b2, block_budget_bytes=16 * 1024)
    out2 = jax.block_until_ready(out2)
    assert jnp.allclose(out2, ref, atol=1e-5, rtol=1e-5), "tiled path mismatch vs reference"

    print("KERNEL_OK")
</pallas_src>

<mosaic_0001>
module attributes {stable_mosaic.version = 11 : i64} {
  func.func @_ca_fused_kernel(%arg0: i32, %arg1: memref<1x32x256xf32, #tpu.memory_space<vmem>>, %arg2: memref<32x2xf32, #tpu.memory_space<vmem>>, %arg3: memref<1x2xf32, #tpu.memory_space<vmem>>, %arg4: memref<2x32xf32, #tpu.memory_space<vmem>>, %arg5: memref<1x32xf32, #tpu.memory_space<vmem>>, %arg6: memref<1x32x256xf32, #tpu.memory_space<vmem>>) attributes {dimension_semantics = [#tpu.dimension_semantics<parallel>], iteration_bounds = array<i64: 2>, scalar_prefetch = 0 : i64, scratch_operands = 0 : i64, tpu.core_type = #tpu.core_type<tc>, window_params = [{transform_indices = @transform_0, window_bounds = array<i64: 1, 32, 256>}, {pipeline_mode = #tpu.pipeline_mode<synchronous>, transform_indices = @transform_1, window_bounds = array<i64: 32, 2>}, {pipeline_mode = #tpu.pipeline_mode<synchronous>, transform_indices = @transform_2, window_bounds = array<i64: 1, 2>}, {pipeline_mode = #tpu.pipeline_mode<synchronous>, transform_indices = @transform_3, window_bounds = array<i64: 2, 32>}, {pipeline_mode = #tpu.pipeline_mode<synchronous>, transform_indices = @transform_4, window_bounds = array<i64: 1, 32>}, {transform_indices = @transform_5, window_bounds = array<i64: 1, 32, 256>}]} {
    %c0 = arith.constant 0 : index
    %c0_0 = arith.constant 0 : index
    %c0_1 = arith.constant 0 : index
    %0 = vector.load %arg1[%c0, %c0_0, %c0_1] : memref<1x32x256xf32, #tpu.memory_space<vmem>>, vector<1x32x256xf32>
    %cst = arith.constant dense<0.000000e+00> : vector<1x32xf32>
    %1 = vector.multi_reduction <add>, %0, %cst [2] : vector<1x32x256xf32> to vector<1x32xf32>
    %cst_2 = arith.constant 2.560000e+02 : f32
    %2 = vector.broadcast %cst_2 : f32 to vector<1x32xf32>
    %3 = arith.divf %1, %2 : vector<1x32xf32>
    %cst_3 = arith.constant dense<0xFF800000> : vector<1x32xf32>
    %4 = vector.multi_reduction <maximumf>, %0, %cst_3 [2] : vector<1x32x256xf32> to vector<1x32xf32>
    %5 = tpu.concatenate %3, %4 in 0 : vector<1x32xf32>, vector<1x32xf32> -> vector<2x32xf32>
    %c0_4 = arith.constant 0 : index
    %c0_5 = arith.constant 0 : index
    %6 = vector.load %arg2[%c0_4, %c0_5] : memref<32x2xf32, #tpu.memory_space<vmem>>, vector<32x2xf32>
    %cst_6 = arith.constant dense<0.000000e+00> : vector<2x2xf32>
    %7 = tpu.matmul %5, %6, %cst_6 {dimension_numbers = #tpu.dot_dimension_numbers<[1], [0], [0], [1], [0, 0, 1, 1], [], []>} : vector<2x32xf32>, vector<32x2xf32>, vector<2x2xf32> -> vector<2x2xf32>
    %c0_7 = arith.constant 0 : index
    %c0_8 = arith.constant 0 : index
    %8 = vector.load %arg3[%c0_7, %c0_8] : memref<1x2xf32, #tpu.memory_space<vmem>>, vector<1x2xf32>
    %9 = vector.broadcast %8 : vector<1x2xf32> to vector<2x2xf32>
    %10 = arith.addf %7, %9 : vector<2x2xf32>
    %cst_9 = arith.constant 0.000000e+00 : f32
    %11 = vector.broadcast %cst_9 : f32 to vector<2x2xf32>
    %12 = arith.maximumf %10, %11 : vector<2x2xf32>
    %c0_10 = arith.constant 0 : index
    %c0_11 = arith.constant 0 : index
    %13 = vector.load %arg4[%c0_10, %c0_11] : memref<2x32xf32, #tpu.memory_space<vmem>>, vector<2x32xf32>
    %cst_12 = arith.constant dense<0.000000e+00> : vector<2x32xf32>
    %14 = tpu.matmul %12, %13, %cst_12 {dimension_numbers = #tpu.dot_dimension_numbers<[1], [0], [0], [1], [0, 0, 1, 1], [], []>} : vector<2x2xf32>, vector<2x32xf32>, vector<2x32xf32> -> vector<2x32xf32>
    %c0_13 = arith.constant 0 : index
    %c0_14 = arith.constant 0 : index
    %15 = vector.load %arg5[%c0_13, %c0_14] : memref<1x32xf32, #tpu.memory_space<vmem>>, vector<1x32xf32>
    %16 = vector.broadcast %15 : vector<1x32xf32> to vector<2x32xf32>
    %17 = arith.addf %14, %16 : vector<2x32xf32>
    %18 = vector.extract_strided_slice %17 {offsets = [0, 0], sizes = [1, 32], strides = [1, 1]} : vector<2x32xf32> to vector<1x32xf32>
    %19 = vector.extract_strided_slice %17 {offsets = [1, 0], sizes = [1, 32], strides = [1, 1]} : vector<2x32xf32> to vector<1x32xf32>
    %20 = arith.addf %18, %19 : vector<1x32xf32>
    %21 = arith.negf %20 : vector<1x32xf32>
    %22 = math.exp %21 : vector<1x32xf32>
    %cst_15 = arith.constant 1.000000e+00 : f32
    %23 = vector.broadcast %cst_15 : f32 to vector<1x32xf32>
    %24 = arith.addf %23, %22 : vector<1x32xf32>
    %25 = arith.divf %23, %24 : vector<1x32xf32>
    %26 = vector.shape_cast %25 : vector<1x32xf32> to vector<1x32x1xf32>
    %27 = vector.broadcast %26 : vector<1x32x1xf32> to vector<1x32x256xf32>
    %28 = arith.mulf %0, %27 : vector<1x32x256xf32>
    %c0_16 = arith.constant 0 : index
    %c0_17 = arith.constant 0 : index
    %c0_18 = arith.constant 0 : index
    %29 = vector.load %arg6[%c0_16, %c0_17, %c0_18] : memref<1x32x256xf32, #tpu.memory_space<vmem>>, vector<1x32x256xf32>
    tpu.vector_store %arg6[%c0_16, %c0_17, %c0_18], %28 {strides = array<i32>} : memref<1x32x256xf32, #tpu.memory_space<vmem>>, vector<1x32x256xf32>,
    return
  }
  func.func @transform_0(%arg0: i32) -> (i32, i32, i32) {
    %c0_i32 = arith.constant 0 : i32
    %c0_i32_0 = arith.constant 0 : i32
    %c0_i32_1 = arith.constant 0 : i32
    return %arg0, %c0_i32, %c0_i32_0 : i32, i32, i32
  }
  func.func @transform_1(%arg0: i32) -> (i32, i32) {
    %c0_i32 = arith.constant 0 : i32
    %c0_i32_0 = arith.constant 0 : i32
    %c0_i32_1 = arith.constant 0 : i32
    return %c0_i32, %c0_i32_0 : i32, i32
  }
  func.func @transform_2(%arg0: i32) -> (i32, i32) {
    %c0_i32 = arith.constant 0 : i32
    %c0_i32_0 = arith.constant 0 : i32
    %c0_i32_1 = arith.constant 0 : i32
    return %c0_i32, %c0_i32_0 : i32, i32
  }
  func.func @transform_3(%arg0: i32) -> (i32, i32) {
    %c0_i32 = arith.constant 0 : i32
    %c0_i32_0 = arith.constant 0 : i32
    %c0_i32_1 = arith.constant 0 : i32
    return %c0_i32, %c0_i32_0 : i32, i32
  }
  func.func @transform_4(%arg0: i32) -> (i32, i32) {
    %c0_i32 = arith.constant 0 : i32
    %c0_i32_0 = arith.constant 0 : i32
    %c0_i32_1 = arith.constant 0 : i32
    return %c0_i32, %c0_i32_0 : i32, i32
  }
  func.func @transform_5(%arg0: i32) -> (i32, i32, i32) {
    %c0_i32 = arith.constant 0 : i32
    %c0_i32_0 = arith.constant 0 : i32
    %c0_i32_1 = arith.constant 0 : i32
    return %arg0, %c0_i32, %c0_i32_0 : i32, i32, i32
  }
}

</mosaic_0001>

<llo_original>
// kernel: tpu_custom_call.1
$region0: #{tpu_custom_call.1}
  #allocation0 [shape = 'u32[]', space=smem, size = 0x4, offset = 0x4, fixed_abs, tag = 'smem constant byte address 0x4 - core index']
  #allocation1 [shape = 'u32[144,128]{1,0:T(1,128)}', space=vmem, size = 0x12000, scoped, tag = 'internal scratch']
  %s0 = inlined_call_operand.hbm [shape: f32[2,32,256], index: 0, kind: input, shape index: {}]
  %s1 = inlined_call_operand.vmem [shape: f32[32,2], index: 1, kind: input, shape index: {}]
  %s2 = inlined_call_operand.vmem [shape: f32[1,2], index: 2, kind: input, shape index: {}]
  %s3 = inlined_call_operand.vmem [shape: f32[2,32], index: 3, kind: input, shape index: {}]
  %s4 = inlined_call_operand.vmem [shape: f32[1,32], index: 4, kind: input, shape index: {}]
  %s5 = inlined_call_operand.hbm [shape: f32[2,32,256], index: 5, kind: output, shape index: {}]
  %s6 = sld [smem:[#allocation0]]
  $region57: #{tpu_custom_call.1} parent=0
    _
  %s8 = ssub.s32 1, %s6
  %s9 = scalar_select 0, %s8, %s6
  $region1: #{tpu_custom_call.1} parent=0
    #allocation2 [shape = 'u8[65536]{0}', space=vmem, size = 0x10000, scoped, tag = 'input window, operand 0']
    #allocation3 [shape = 's32[2]{0}', space=sflag, size = 0x8, scoped, tag = 'scoped memory for tpu_custom_call.1']
    #allocation4 [shape = 's32[2]{0}', space=sflag, size = 0x8, scoped, tag = 'scoped memory for tpu_custom_call.1']
    #allocation5 [shape = 'u8[65536]{0}', space=vmem, size = 0x10000, scoped, tag = 'output window, operand 0']
    %10 = vsyncpa [#allocation3], 0
    %s11 = scalar_lea.sflag [#allocation3], 1
    %12 = vsyncpa %s11, 0
    %13 = vsyncpa [#allocation4], 0
    %s14 = scalar_lea.sflag [#allocation4], 1
    %15 = vsyncpa %s14, 0
    loop: start=0, step=1, limit=4
    $region2: #{tpu_custom_call.1} parent=1 // loop_pre_header
      _
    $region3: #{tpu_custom_call.1} parent=1 // loop_header
      %s17 = sphi 0, %s21
      %p18 = scmp.ge.s32.totalorder %s17, 4
      %s27 = sphi 0, %s29
      %s30 = sphi 0, %s27
      %s31 = sphi 0, %s30
      %s47 = sphi 0, %s31
      %s51 = sphi 0, %s51
      %s53 = sphi 0, %s51
      %s54 = sphi 0, %s53
      %s68 = sphi 0, %s54
      %s72 = sphi 0, %s72
      %s74 = sphi 0, %s72
      %s75 = sphi 0, %s74
      %s89 = sphi 0, %s75
      %s93 = sphi 0, %s93
      %s95 = sphi 0, %s93
      %s96 = sphi 0, %s95
      %s110 = sphi 0, %s96
      %s114 = sphi 0, %s114
      %s116 = sphi 0, %s114
      %s117 = sphi 0, %s116
      %s131 = sphi 0, %s117
      %s137 = sphi 0, %s139
      %s140 = sphi 0, %s137
      %s141 = sphi 0, %s140
      %s157 = sphi 0, %s141
    $region4: #{tpu_custom_call.1} parent=1 // loop_header_branch
      %20 = sbr.rel (%p18) target = $region8
    $region5: #{tpu_custom_call.1} parent=1 // loop_body
      %s22 = ssub.s32 %s17, 1
      %s23 = ssub.s32 %s17, 2
      %s24 = sadd.s32 %s17, 1
      %s25 = ssub.s32 %s17, %s24
      %p26 = scmp.eq.s32.totalorder %s25, 0
      %s28 = sadd.s32 %s27, 1
      %s29 = scalar_select %p26, %s27, %s28
      %p32 = pneg %p26
      %p33 = scmp.eq.s32.totalorder %s17, 1
      %p34 = por %p32, %p33
      %p35 = scmp.ne.s32.totalorder %s27, %s30
      %p36 = scmp.eq.s32.totalorder %s17, 0
      %p37 = por %p35, %p36
      %p38 = scmp.ne.s32.totalorder %s27, %s30
      %p39 = scmp.eq.s32.totalorder %s22, 1
      %p40 = por %p38, %p39
      %p41 = scmp.ne.s32.totalorder %s30, %s31
      %p42 = scmp.eq.s32.totalorder %s22, 0
      %p43 = por %p41, %p42
      %p44 = scmp.ne.s32.totalorder %s30, %s31
      %p45 = scmp.eq.s32.totalorder %s23, 1
      %p46 = por %p44, %p45
      %p48 = scmp.ne.s32.totalorder %s31, %s47
      %p49 = scmp.eq.s32.totalorder %s23, 0
      %p50 = por %p48, %p49
      %s52 = sadd.s32 %s51, 1
      %p55 = scmp.eq.s32.totalorder %s17, 1
      %p56 = scmp.ne.s32.totalorder %s51, %s53
      %p57 = scmp.eq.s32.totalorder %s17, 0
      %p58 = por %p56, %p57
      %p59 = scmp.ne.s32.totalorder %s51, %s53
      %p60 = scmp.eq.s32.totalorder %s22, 1
      %p61 = por %p59, %p60
      %p62 = scmp.ne.s32.totalorder %s53, %s54
      %p63 = scmp.eq.s32.totalorder %s22, 0
      %p64 = por %p62, %p63
      %p65 = scmp.ne.s32.totalorder %s53, %s54
      %p66 = scmp.eq.s32.totalorder %s23, 1
      %p67 = por %p65, %p66
      %p69 = scmp.ne.s32.totalorder %s54, %s68
      %p70 = scmp.eq.s32.totalorder %s23, 0
      %p71 = por %p69, %p70
      %s73 = sadd.s32 %s72, 1
      %p76 = scmp.eq.s32.totalorder %s17, 1
      %p77 = scmp.ne.s32.totalorder %s72, %s74
      %p78 = scmp.eq.s32.totalorder %s17, 0
      %p79 = por %p77, %p78
      %p80 = scmp.ne.s32.totalorder %s72, %s74
      %p81 = scmp.eq.s32.totalorder %s22, 1
      %p82 = por %p80, %p81
      %p83 = scmp.ne.s32.totalorder %s74, %s75
      %p84 = scmp.eq.s32.totalorder %s22, 0
      %p85 = por %p83, %p84
      %p86 = scmp.ne.s32.totalorder %s74, %s75
      %p87 = scmp.eq.s32.totalorder %s23, 1
      %p88 = por %p86, %p87
      %p90 = scmp.ne.s32.totalorder %s75, %s89
      %p91 = scmp.eq.s32.totalorder %s23, 0
      %p92 = por %p90, %p91
      %s94 = sadd.s32 %s93, 1
      %p97 = scmp.eq.s32.totalorder %s17, 1
      %p98 = scmp.ne.s32.totalorder %s93, %s95
      %p99 = scmp.eq.s32.totalorder %s17, 0
      %p100 = por %p98, %p99
      %p101 = scmp.ne.s32.totalorder %s93, %s95
      %p102 = scmp.eq.s32.totalorder %s22, 1
      %p103 = por %p101, %p102
      %p104 = scmp.ne.s32.totalorder %s95, %s96
      %p105 = scmp.eq.s32.totalorder %s22, 0
      %p106 = por %p104, %p105
      %p107 = scmp.ne.s32.totalorder %s95, %s96
      %p108 = scmp.eq.s32.totalorder %s23, 1
      %p109 = por %p107, %p108
      %p111 = scmp.ne.s32.totalorder %s96, %s110
      %p112 = scmp.eq.s32.totalorder %s23, 0
      %p113 = por %p111, %p112
      %s115 = sadd.s32 %s114, 1
      %p118 = scmp.eq.s32.totalorder %s17, 1
      %p119 = scmp.ne.s32.totalorder %s114, %s116
      %p120 = scmp.eq.s32.totalorder %s17, 0
      %p121 = por %p119, %p120
      %p122 = scmp.ne.s32.totalorder %s114, %s116
      %p123 = scmp.eq.s32.totalorder %s22, 1
      %p124 = por %p122, %p123
      %p125 = scmp.ne.s32.totalorder %s116, %s117
      %p126 = scmp.eq.s32.totalorder %s22, 0
      %p127 = por %p125, %p126
      %p128 = scmp.ne.s32.totalorder %s116, %s117
      %p129 = scmp.eq.s32.totalorder %s23, 1
      %p130 = por %p128, %p129
      %p132 = scmp.ne.s32.totalorder %s117, %s131
      %p133 = scmp.eq.s32.totalorder %s23, 0
      %p134 = por %p132, %p133
      %s135 = ssub.s32 %s17, %s24
      %p136 = scmp.eq.s32.totalorder %s135, 0
      %s138 = sadd.s32 %s137, 1
      %s139 = scalar_select %p136, %s137, %s138
      %p142 = pneg %p136
      %p143 = scmp.eq.s32.totalorder %s17, 1
      %p144 = por %p142, %p143
      %p145 = scmp.ne.s32.totalorder %s137, %s140
      %p146 = scmp.eq.s32.totalorder %s17, 0
      %p147 = por %p145, %p146
      %p148 = scmp.ne.s32.totalorder %s137, %s140
      %p149 = scmp.eq.s32.totalorder %s22, 1
      %p150 = por %p148, %p149
      %p151 = scmp.ne.s32.totalorder %s140, %s141
      %p152 = scmp.eq.s32.totalorder %s22, 0
      %p153 = por %p151, %p152
      %p154 = scmp.ne.s32.totalorder %s140, %s141
      %p155 = scmp.eq.s32.totalorder %s23, 1
      %p156 = por %p154, %p155
      %p158 = scmp.ne.s32.totalorder %s141, %s157
      %p159 = scmp.eq.s32.totalorder %s23, 0
      %p160 = por %p158, %p159
      %p161 = scmp.le.s32.totalorder 1, %s17
      %p162 = scmp.lt.s32.totalorder %s17, 3
      %p163 = pnand %p161, %p162
      %p164 = pneg %p163
      // Predicated region
      $region9: #{tpu_custom_call.1} parent=5 // pred_check
        _
      $region10: #{tpu_custom_call.1} parent=5 // pred_check_branch
        %166 = sbr.rel (%p163) target = $region12
      $region11: #{tpu_custom_call.1} parent=5 // pred_region
        %s167 = ssub.s32 %s17, 1
        // Predicated region
        $region13: #{tpu_custom_call.1} parent=11 // pred_check
          %p168 = pneg %p64
        $region14: #{tpu_custom_call.1} parent=11 // pred_check_branch
          %170 = sbr.rel (%p168) target = $region16
        $region15: #{tpu_custom_call.1} parent=11 // pred_region
          _
        $region16: #{tpu_custom_call.1} parent=11 // pred_fallthru
          _
        // Predicated region
        $region17: #{tpu_custom_call.1} parent=11 // pred_check
          %p171 = pneg %p85
        $region18: #{tpu_custom_call.1} parent=11 // pred_check_branch
          %173 = sbr.rel (%p171) target = $region20
        $region19: #{tpu_custom_call.1} parent=11 // pred_region
          _
        $region20: #{tpu_custom_call.1} parent=11 // pred_fallthru
          _
        // Predicated region
        $region21: #{tpu_custom_call.1} parent=11 // pred_check
          %p174 = pneg %p106
        $region22: #{tpu_custom_call.1} parent=11 // pred_check_branch
          %176 = sbr.rel (%p174) target = $region24
        $region23: #{tpu_custom_call.1} parent=11 // pred_region
          _
        $region24: #{tpu_custom_call.1} parent=11 // pred_fallthru
          _
        // Predicated region
        $region25: #{tpu_custom_call.1} parent=11 // pred_check
          %p177 = pneg %p127
        $region26: #{tpu_custom_call.1} parent=11 // pred_check_branch
          %179 = sbr.rel (%p177) target = $region28
        $region27: #{tpu_custom_call.1} parent=11 // pred_region
          _
        $region28: #{tpu_custom_call.1} parent=11 // pred_fallthru
          _
      $region12: #{tpu_custom_call.1} parent=5 // pred_fallthru
        _
      %p180 = scmp.lt.s32.totalorder %s17, 2
      // Predicated region
      $region29: #{tpu_custom_call.1} parent=5 // pred_check
        %p181 = pneg %p180
      $region30: #{tpu_custom_call.1} parent=5 // pred_check_branch
        %183 = sbr.rel (%p181) target = $region32
      $region31: #{tpu_custom_call.1} parent=5 // pred_region
        // Predicated region
        $region33: #{tpu_custom_call.1} parent=31 // pred_check
          %p184 = pneg %p37
        $region34: #{tpu_custom_call.1} parent=31 // pred_check_branch
          %186 = sbr.rel (%p184) target = $region36
        $region35: #{tpu_custom_call.1} parent=31 // pred_region
          %s187 = sand.u32 %s27, 1
          %s188 = scalar_lea.sflag [#allocation3], %s187
          %s189 = sand.u32 %s27, 1
          %s190 = smul.addr %s189, 64
          %s191 = scalar_lea.vmem [#allocation2], %s190
          %s193 = ssub.s32 1024, 1024
          %194 = vsyncadd %s188, %s193
          %s195 = smul.addr %s17, 8
          %s196 = smul.addr %s195, 128
          %s197 = scalar_lea.hbm %s0, %s196
          %s198 = sshll.u32 %s191, 4
          %s199 = int_to_ptr.vmem [resolvable:$true] %s198
          %204 = dma.hbm_to_vmem [thread:$0]  %s197, 1024, %s199, %s188, 256, 256, 16
        $region36: #{tpu_custom_call.1} parent=31 // pred_fallthru
          _
      $region32: #{tpu_custom_call.1} parent=5 // pred_fallthru
        _
      %p205 = scmp.le.s32.totalorder 1, %s17
      %p206 = scmp.lt.s32.totalorder %s17, 3
      %p207 = pnand %p205, %p206
      %p208 = pneg %p207
      // Predicated region
      $region37: #{tpu_custom_call.1} parent=5 // pred_check
        _
      $region38: #{tpu_custom_call.1} parent=5 // pred_check_branch
        %210 = sbr.rel (%p207) target = $region40
      $region39: #{tpu_custom_call.1} parent=5 // pred_region
        %s211 = ssub.s32 %s17, 1
        %s212 = sand.u32 %s30, 1
        %s213 = scalar_lea.sflag [#allocation3], %s212
        %s214 = sand.u32 %s30, 1
        %s215 = smul.addr %s214, 64
        %s216 = scalar_lea.vmem [#allocation2], %s215
        // Predicated region
        $region41: #{tpu_custom_call.1} parent=39 // pred_check
          %p217 = pneg %p43
        $region42: #{tpu_custom_call.1} parent=39 // pred_check_branch
          %219 = sbr.rel (%p217) target = $region44
        $region43: #{tpu_custom_call.1} parent=39 // pred_region
          %220 = dma.done %s213, 1024
        $region44: #{tpu_custom_call.1} parent=39 // pred_fallthru
          _
        %s221 = sand.u32 %s30, 1
        %s222 = scalar_lea.sflag [#allocation3], %s221
        %s223 = sand.u32 %s30, 1
        %s224 = smul.addr %s223, 64
        %s225 = scalar_lea.vmem [#allocation2], %s224
        %p226 = pneg %p43
        %p227 = pneg %p40
        %p228 = pneg %p64
        %p229 = pneg %p61
        %p230 = pneg %p85
        %p231 = pneg %p82
        %p232 = pneg %p106
        %p233 = pneg %p103
        %p234 = pneg %p127
        %p235 = pneg %p124
        %p236 = pneg %p153
        %p237 = pneg %p150
        %s238 = sand.u32 %s140, 1
        %s239 = scalar_lea.sflag [#allocation4], %s238
        %s240 = sand.u32 %s140, 1
        %s241 = smul.addr %s240, 64
        %s242 = scalar_lea.vmem [#allocation5], %s241
        %v243 = vld [vmem:[%s216] sm:$0xff]
        %v244 = vld [vmem:[%s216 + $0x8] sm:$0xff]
        %v245 = vld [vmem:[%s216 + $0x10] sm:$0xff]
        %v246 = vld [vmem:[%s216 + $0x18] sm:$0xff]
        %v247 = vld [vmem:[%s216 + $0x20] sm:$0xff]
        %v248 = vld [vmem:[%s216 + $0x28] sm:$0xff]
        %v249 = vld [vmem:[%s216 + $0x30] sm:$0xff]
        %v250 = vld [vmem:[%s216 + $0x38] sm:$0xff]
        %v251 = vadd.f32 %v243, %v244
        %252 = vadd.xlane.f32.xlu0 %v251
        %v253 = vpop.xlane.xlu0 %252
        %v254 = vadd.f32 %v245, %v246
        %255 = vadd.xlane.f32.xlu0 %v254
        %v256 = vpop.xlane.xlu0 %255
        %v257 = vadd.f32 %v247, %v248
        %258 = vadd.xlane.f32.xlu0 %v257
        %v259 = vpop.xlane.xlu0 %258
        %v260 = vadd.f32 %v249, %v250
        %261 = vadd.xlane.f32.xlu0 %v260
        %v262 = vpop.xlane.xlu0 %261
        %v263 = vrcp.pop 256.0
        %v264 = vmul.f32 %v253, %v263
        %v265 = vmul.f32 %v256, %v263
        %v266 = vmul.f32 %v259, %v263
        %v267 = vmul.f32 %v262, %v263
        %v268 = vmax.f32 %v243, %v244
        %269 = vmax.xlane.f32.xlu0 %v268
        %v270 = vpop.xlane.xlu0 %269
        %v271 = vmax.f32 %v245, %v246
        %272 = vmax.xlane.f32.xlu0 %v271
        %v273 = vpop.xlane.xlu0 %272
        %v274 = vmax.f32 %v247, %v248
        %275 = vmax.xlane.f32.xlu0 %v274
        %v276 = vpop.xlane.xlu0 %275
        %v277 = vmax.f32 %v249, %v250
        %278 = vmax.xlane.f32.xlu0 %v277
        %v279 = vpop.xlane.xlu0 %278
        %v284 = vlaneseq
        %v285 = vand.u32 %v284, 127
        %v286 = vlaneseq
        %v287 = vshrl.u32 %v286, 7
        %v288 = vsub.s32 %v285, %v287
        %v289 = vrot.slane %v264, %v288
        %v290 = vadd.s32 %v285, 4294967288
        %v291 = vlaneseq
        %v292 = vshrl.u32 %v291, 7
        %v293 = vsub.s32 %v290, %v292
        %v294 = vrot.slane %v265, %v293
        %vm295 = vcmask 130112
        %v296 = vsel %vm295, %v294, %v289
        %v297 = vadd.s32 %v285, 4294967280
        %v298 = vlaneseq
        %v299 = vshrl.u32 %v298, 7
        %v300 = vsub.s32 %v297, %v299
        %v301 = vrot.slane %v266, %v300
        %vm302 = vcmask 195712
        %v303 = vsel %vm302, %v301, %v296
        %v304 = vadd.s32 %v285, 4294967272
        %v305 = vlaneseq
        %v306 = vshrl.u32 %v305, 7
        %v307 = vsub.s32 %v304, %v306
        %v308 = vrot.slane %v267, %v307
        %vm309 = vcmask 261312
        %v310 = vsel %vm309, %v308, %v303
        %v316 = vlaneseq
        %v317 = vshrl.u32 %v316, 7
        %v318 = vsub.s32 %v285, %v317
        %v319 = vrot.slane %v270, %v318
        %v320 = vlaneseq
        %v321 = vshrl.u32 %v320, 7
        %v322 = vsub.s32 %v290, %v321
        %v323 = vrot.slane %v273, %v322
        %v324 = vsel %vm295, %v323, %v319
        %v325 = vlaneseq
        %v326 = vshrl.u32 %v325, 7
        %v327 = vsub.s32 %v297, %v326
        %v328 = vrot.slane %v276, %v327
        %v329 = vsel %vm302, %v328, %v324
        %v330 = vlaneseq
        %v331 = vshrl.u32 %v330, 7
        %v332 = vsub.s32 %v304, %v331
        %v333 = vrot.slane %v279, %v332
        %v334 = vsel %vm309, %v333, %v329
        %vm336 = vcmask 1040384
        %v337 = vsel %vm336, %v310, %v334
        %v338 = vld [vmem:[%s1] sm:$0xff]
        %v339 = vld [vmem:[%s1 + $0x8] sm:$0xff]
        %v340 = vld [vmem:[%s1 + $0x10] sm:$0xff]
        %v341 = vld [vmem:[%s1 + $0x18] sm:$0xff]
        %v342 = vld [vmem:[%s2] sm:$0x1]
        %v344 = vlaneseq
        %v345 = vshrl.u32 %v344, 7
        %v346 = vsub.s32 0, %v345
        %v347 = vrot.slane %v342, %v346
        %vm349 = vcmask 261120
        %v351 = vsel %vm349, %v337, 0
        %353 = vmatprep.subr.mxu0 0.0
        %354 = vmatpush1.msra.mxu0 %v338
        %355 = vmatprep.subr.mxu0 0.0
        %356 = vmatpush1.msra.mxu0 %v339
        %357 = vmatprep.subr.mxu0 0.0
        %358 = vmatpush1.msra.mxu0 %v340
        %359 = vmatprep.subr.mxu0 0.0
        %360 = vmatpush1.msra.mxu0 %v341
        %361 = vmatprep.subr.mxu0 0.0
        %362 = vmatpush1.msra.mxu0 0.0
        %363 = vmatprep.subr.mxu0 0.0
        %364 = vmatpush1.msra.mxu0 0.0
        %365 = vmatprep.subr.mxu0 0.0
        %366 = vmatpush1.msra.mxu0 0.0
        %367 = vmatprep.subr.mxu0 0.0
        %368 = vmatpush1.msra.mxu0 0.0
        %369 = vmatprep.subr.mxu0 0.0
        %370 = vmatpush1.msra.mxu0 0.0
        %371 = vmatprep.subr.mxu0 0.0
        %372 = vmatpush1.msra.mxu0 0.0
        %373 = vmatprep.subr.mxu0 0.0
        %374 = vmatpush1.msra.mxu0 0.0
        %375 = vmatprep.subr.mxu0 0.0
        %376 = vmatpush1.msra.mxu0 0.0
        %377 = vmatprep.subr.mxu0 0.0
        %378 = vmatpush1.msra.mxu0 0.0
        %379 = vmatprep.subr.mxu0 0.0
        %380 = vmatpush1.msra.mxu0 0.0
        %381 = vmatprep.subr.mxu0 0.0
        %382 = vmatpush1.msra.mxu0 0.0
        %383 = vmatprep.subr.mxu0 0.0
        %384 = vmatpush1.msra.mxu0 0.0
        %385 = vmatprep.subr.mxu0 0.0
        %386 = vmatpush1.msra.mxu0 0.0
        %387 = vmatprep.subr.mxu0 0.0
        %388 = vmatpush1.msra.mxu0 0.0
        %389 = vmatprep.subr.mxu0 0.0
        %390 = vmatpush1.msra.mxu0 0.0
        %391 = vmatprep.subr.mxu0 0.0
        %392 = vmatpush1.msra.mxu0 0.0
        %393 = vmatprep.subr.mxu0 0.0
        %394 = vmatpush1.msra.mxu0 0.0
        %395 = vmatprep.subr.mxu0 0.0
        %396 = vmatpush1.msra.mxu0 0.0
        %397 = vmatprep.subr.mxu0 0.0
        %398 = vmatpush1.msra.mxu0 0.0
        %399 = vmatprep.subr.mxu0 0.0
        %400 = vmatpush1.msra.mxu0 0.0
        %401 = vmatprep.subr.mxu0 0.0
        %402 = vmatpush1.msra.mxu0 0.0
        %403 = vmatprep.subr.mxu0 0.0
        %404 = vmatpush1.msra.mxu0 0.0
        %405 = vmatprep.subr.mxu0 0.0
        %406 = vmatpush1.msra.mxu0 0.0
        %407 = vmatprep.subr.mxu0 0.0
        %408 = vmatpush1.msra.mxu0 0.0
        %409 = vmatprep.subr.mxu0 0.0
        %410 = vmatpush1.msra.mxu0 0.0
        %411 = vmatprep.subr.mxu0 0.0
        %412 = vmatpush1.msra.mxu0 0.0
        %413 = vmatprep.subr.mxu0 0.0
        %414 = vmatpush1.msra.mxu0 0.0
        %415 = vmatprep.subr.mxu0 0.0
        %416 = vmatpush1.msra.mxu0 0.0
        %417 = vmatprep.mubr.f32.mxu0 0.0
        %418 = vmatmul.mubr.f32.gmra.mrb[0].mxu0 %v351
        %v419 = vpop.f32.mrb[0].mxu0
        %v420 = vadd.f32 %v347, %v419
        %v421 = vpop.f32.mrb[0].mxu0
        %422 = vdwg.mxu0
        %v423 = vmax.f32 %v420, 0.0
        %v424 = vld [vmem:[%s3] sm:$0x3]
        %v425 = vld [vmem:[%s4] sm:$0x1]
        %v427 = vlaneseq
        %v428 = vshrl.u32 %v427, 7
        %v429 = vsub.s32 0, %v428
        %v430 = vrot.slane %v425, %v429
        %vm432 = vcmask 15360
        %v434 = vsel %vm432, %v423, 0
        %vm436 = vcmask 1041408
        %v438 = vsel %vm436, %v424, 0
        %440 = vmatprep.subr.mxu0 0.0
        %441 = vmatpush1.msra.mxu0 %v438
        %442 = vmatprep.subr.mxu0 0.0
        %443 = vmatpush1.msra.mxu0 0.0
        %444 = vmatprep.subr.mxu0 0.0
        %445 = vmatpush1.msra.mxu0 0.0
        %446 = vmatprep.subr.mxu0 0.0
        %447 = vmatpush1.msra.mxu0 0.0
        %448 = vmatprep.subr.mxu0 0.0
        %449 = vmatpush1.msra.mxu0 0.0
        %450 = vmatprep.subr.mxu0 0.0
        %451 = vmatpush1.msra.mxu0 0.0
        %452 = vmatprep.subr.mxu0 0.0
        %453 = vmatpush1.msra.mxu0 0.0
        %454 = vmatprep.subr.mxu0 0.0
        %455 = vmatpush1.msra.mxu0 0.0
        %456 = vmatprep.subr.mxu0 0.0
        %457 = vmatpush1.msra.mxu0 0.0
        %458 = vmatprep.subr.mxu0 0.0
        %459 = vmatpush1.msra.mxu0 0.0
        %460 = vmatprep.subr.mxu0 0.0
        %461 = vmatpush1.msra.mxu0 0.0
        %462 = vmatprep.subr.mxu0 0.0
        %463 = vmatpush1.msra.mxu0 0.0
        %464 = vmatprep.subr.mxu0 0.0
        %465 = vmatpush1.msra.mxu0 0.0
        %466 = vmatprep.subr.mxu0 0.0
        %467 = vmatpush1.msra.mxu0 0.0
        %468 = vmatprep.subr.mxu0 0.0
        %469 = vmatpush1.msra.mxu0 0.0
        %470 = vmatprep.subr.mxu0 0.0
        %471 = vmatpush1.msra.mxu0 0.0
        %472 = vmatprep.subr.mxu0 0.0
        %473 = vmatpush1.msra.mxu0 0.0
        %474 = vmatprep.subr.mxu0 0.0
        %475 = vmatpush1.msra.mxu0 0.0
        %476 = vmatprep.subr.mxu0 0.0
        %477 = vmatpush1.msra.mxu0 0.0
        %478 = vmatprep.subr.mxu0 0.0
        %479 = vmatpush1.msra.mxu0 0.0
        %480 = vmatprep.subr.mxu0 0.0
        %481 = vmatpush1.msra.mxu0 0.0
        %482 = vmatprep.subr.mxu0 0.0
        %483 = vmatpush1.msra.mxu0 0.0
        %484 = vmatprep.subr.mxu0 0.0
        %485 = vmatpush1.msra.mxu0 0.0
        %486 = vmatprep.subr.mxu0 0.0
        %487 = vmatpush1.msra.mxu0 0.0
        %488 = vmatprep.subr.mxu0 0.0
        %489 = vmatpush1.msra.mxu0 0.0
        %490 = vmatprep.subr.mxu0 0.0
        %491 = vmatpush1.msra.mxu0 0.0
        %492 = vmatprep.subr.mxu0 0.0
        %493 = vmatpush1.msra.mxu0 0.0
        %494 = vmatprep.subr.mxu0 0.0
        %495 = vmatpush1.msra.mxu0 0.0
        %496 = vmatprep.subr.mxu0 0.0
        %497 = vmatpush1.msra.mxu0 0.0
        %498 = vmatprep.subr.mxu0 0.0
        %499 = vmatpush1.msra.mxu0 0.0
        %500 = vmatprep.subr.mxu0 0.0
        %501 = vmatpush1.msra.mxu0 0.0
        %502 = vmatprep.subr.mxu0 0.0
        %503 = vmatpush1.msra.mxu0 0.0
        %504 = vmatprep.mubr.f32.mxu0 0.0
        %505 = vmatmul.mubr.f32.gmra.mrb[0].mxu0 %v434
        %v506 = vpop.f32.mrb[0].mxu0
        %v507 = vadd.f32 %v430, %v506
        %v508 = vpop.f32.mrb[0].mxu0
        %509 = vdwg.mxu0
        %v511 = vrot.slane %v507, 1
        %v513 = vadd.f32 %v507, %v511
        %v514 = vxor.u32 %v513, 2147483648
        %v515 = vmul.f32 %v514, 1.442695
        %v516 = vpow.pop %v515
        %v517 = vadd.f32 %v516, 1.0
        %v518 = vrcp.pop %v517
        %v519 = vmul.f32 1.0, %v518
        %v520 = vlaneseq
        %v521 = vshrl.u32 %v520, 7
        %v522 = vsub.s32 0, %v521
        %v523 = vrot.slane %v519, %v522
        %525 = vbcast.lane.b32.xlu0 %v523, 256
        %v526 = vpop.permute.xlu0 %525
        %s528 = sor.u32 256, 8
        %529 = vbcast.lane.b32.xlu0 %v523, %s528
        %v530 = vpop.permute.xlu0 %529
        %s532 = sor.u32 256, 16
        %533 = vbcast.lane.b32.xlu0 %v523, %s532
        %v534 = vpop.permute.xlu0 %533
        %s536 = sor.u32 256, 24
        %537 = vbcast.lane.b32.xlu0 %v523, %s536
        %v538 = vpop.permute.xlu0 %537
        %v539 = vmul.f32 %v243, %v526
        %v540 = vmul.f32 %v244, %v526
        %v541 = vmul.f32 %v245, %v530
        %v542 = vmul.f32 %v246, %v530
        %v543 = vmul.f32 %v247, %v534
        %v544 = vmul.f32 %v248, %v534
        %v545 = vmul.f32 %v249, %v538
        %v546 = vmul.f32 %v250, %v538
        %547 = vst [vmem:[%s242] sm:$0xff] %v539
        %548 = vst [vmem:[%s242 + $0x8] sm:$0xff] %v540
        %549 = vst [vmem:[%s242 + $0x10] sm:$0xff] %v541
        %550 = vst [vmem:[%s242 + $0x18] sm:$0xff] %v542
        %551 = vst [vmem:[%s242 + $0x20] sm:$0xff] %v543
        %552 = vst [vmem:[%s242 + $0x28] sm:$0xff] %v544
        %553 = vst [vmem:[%s242 + $0x30] sm:$0xff] %v545
        %554 = vst [vmem:[%s242 + $0x38] sm:$0xff] %v546
        %s555 = sand.u32 %s140, 1
        %s556 = scalar_lea.sflag [#allocation4], %s555
        %s557 = sand.u32 %s140, 1
        %s558 = smul.addr %s557, 64
        %s559 = scalar_lea.vmem [#allocation5], %s558
        // Predicated region
        $region45: #{tpu_custom_call.1} parent=39 // pred_check
          %p560 = pneg %p150
        $region46: #{tpu_custom_call.1} parent=39 // pred_check_branch
          %562 = sbr.rel (%p560) target = $region48
        $region47: #{tpu_custom_call.1} parent=39 // pred_region
          %s564 = ssub.s32 1024, 1024
          %565 = vsyncadd %s556, %s564
          %s566 = smul.addr %s22, 8
          %s567 = smul.addr %s566, 128
          %s568 = scalar_lea.hbm %s5, %s567
          %s569 = sshll.u32 %s559, 4
          %s570 = int_to_ptr.vmem [resolvable:$true] %s569
          %575 = dma.vmem_to_hbm [thread:$0]  %s570, 1024, %s568, %s556, 256, 256, 16
        $region48: #{tpu_custom_call.1} parent=39 // pred_fallthru
          _
      $region40: #{tpu_custom_call.1} parent=5 // pred_fallthru
        _
      %p576 = scmp.le.s32.totalorder 2, %s17
      // Predicated region
      $region49: #{tpu_custom_call.1} parent=5 // pred_check
        %p577 = pneg %p576
      $region50: #{tpu_custom_call.1} parent=5 // pred_check_branch
        %579 = sbr.rel (%p577) target = $region52
      $region51: #{tpu_custom_call.1} parent=5 // pred_region
        %s580 = ssub.s32 %s17, 2
        // Predicated region
        $region53: #{tpu_custom_call.1} parent=51 // pred_check
          %p581 = pneg %p156
        $region54: #{tpu_custom_call.1} parent=51 // pred_check_branch
          %583 = sbr.rel (%p581) target = $region56
        $region55: #{tpu_custom_call.1} parent=51 // pred_region
          %s584 = sand.u32 %s141, 1
          %s585 = scalar_lea.sflag [#allocation4], %s584
          %s586 = sand.u32 %s141, 1
          %s587 = smul.addr %s586, 64
          %s588 = scalar_lea.vmem [#allocation5], %s587
          %589 = dma.done %s585, 1024
        $region56: #{tpu_custom_call.1} parent=51 // pred_fallthru
          _
      $region52: #{tpu_custom_call.1} parent=5 // pred_fallthru
        _
    $region6: #{tpu_custom_call.1} parent=1 // loop_footer
      %s21 = sadd.s32 1, %s17
    $region7: #{tpu_custom_call.1} parent=1 // loop_footer_branch
      %16 = sbr.rel target = $region3
    $region8: #{tpu_custom_call.1} parent=1 // loop_exit
      _
    %590 = vsyncpa [#allocation3], 1
    %s591 = scalar_lea.sflag [#allocation3], 1
    %592 = vsyncpa %s591, 1
    %593 = vsyncpa [#allocation4], 1
    %s594 = scalar_lea.sflag [#allocation4], 1
    %595 = vsyncpa %s594, 1

</llo_original>
